<compile_context>
chip_gen: v7x
topology: tpu7x:2x2x1
jax: 0.10.0
libtpu: 0.0.40
codegen_flags: <defaults>
</compile_context>

<pallas_src>
import functools

import jax
import jax.numpy as jnp
from jax.experimental import pallas as pl
from jax.experimental.pallas import tpu as pltpu

BN_EPS = 1e-5
LANE = 128                  # pad Cout to a multiple of this -> lane-dense stores
TM_TARGET = 512             # M-tile rows: multiple of 256 (v6e/v7x) and 128 (v5e)
MXU_DTYPE = jnp.bfloat16    # MXU operand dtype (f32 accumulation, f32 BN stats)
VMEM_LIMIT = 32 * 1024 * 1024


def _round_up(x, m):
    return ((x + m - 1) // m) * m


# --------------------------------------------------------------------------- #
# Kernels
# --------------------------------------------------------------------------- #
def _matmul_stats_kernel(p_ref, w_ref, conv_ref, sums_ref):
    """Per M-tile: MXU matmul + per-Cout partial sum / sumsq for global BN stats."""
    acc = jnp.dot(p_ref[...], w_ref[...], preferred_element_type=jnp.float32)
    conv_ref[...] = acc
    sums_ref[0, 0:1, :] = jnp.sum(acc, axis=0, keepdims=True)
    sums_ref[0, 1:2, :] = jnp.sum(acc * acc, axis=0, keepdims=True)


def _bn_apply_kernel(x_ref, scale_ref, bias_ref, o_ref, *, apply_relu):
    """Per M-tile: BatchNorm as a single fused FMA (+ optional ReLU)."""
    y = x_ref[...] * scale_ref[...] + bias_ref[...]
    if apply_relu:
        y = jnp.maximum(y, 0.0)  # relup(0.0) == standard ReLU
    o_ref[...] = y.astype(o_ref.dtype)


# --------------------------------------------------------------------------- #
# Wrapper
# --------------------------------------------------------------------------- #
def _im2col(x_nhwc, stride):
    """3x3, padding=1 patch extraction (layout glue, not the hot path)."""
    N, H, W, C = x_nhwc.shape
    Ho = (H + 2 - 3) // stride + 1
    Wo = (W + 2 - 3) // stride + 1
    xp = jnp.pad(x_nhwc, ((0, 0), (1, 1), (1, 1), (0, 0)))
    cols = []
    for kh in range(3):
        for kw in range(3):
            tap = jax.lax.slice(
                xp,
                (0, kh, kw, 0),
                (N, kh + (Ho - 1) * stride + 1, kw + (Wo - 1) * stride + 1, C),
                (1, stride, stride, 1),
            )
            cols.append(tap.reshape(N * Ho * Wo, C))
    return jnp.concatenate(cols, axis=1), (N, Ho, Wo)


def conv3x3_bn(x_nhwc, w_oihw, gamma, beta, *, stride, apply_relu,
               out_dtype=jnp.float32):
    Cout = w_oihw.shape[0]
    patches, (N, Ho, Wo) = _im2col(x_nhwc.astype(MXU_DTYPE), stride)
    M, K = patches.shape

    CP = _round_up(Cout, LANE)                       # lane-dense padded Cout
    TM = TM_TARGET if M >= TM_TARGET else _round_up(M, 8)
    M_pad = _round_up(M, TM)
    if M_pad != M:
        # Zero rows contribute exactly 0 to sum/sumsq -> BN stats stay correct
        # as long as we divide by the TRUE M below.
        patches = jnp.pad(patches, ((0, M_pad - M), (0, 0)))
    nmt = M_pad // TM

    # PyTorch weight (Cout, Cin, kh, kw) -> (9*Cin, Cout), matching the patch
    # column ordering; zero-pad Cout -> CP for lane-dense MXU columns/stores.
    w_mat = jnp.transpose(w_oihw, (2, 3, 1, 0)).reshape(K, Cout)
    w_mat = jnp.pad(w_mat, ((0, 0), (0, CP - Cout))).astype(MXU_DTYPE)

    # Pass 1: tiled matmul + per-tile BN partial statistics.
    conv_out, partials = pl.pallas_call(
        _matmul_stats_kernel,
        grid=(nmt,),
        in_specs=[
            pl.BlockSpec((TM, K), lambda i: (i, 0)),
            pl.BlockSpec((K, CP), lambda i: (0, 0)),
        ],
        out_specs=(
            pl.BlockSpec((TM, CP), lambda i: (i, 0)),
            pl.BlockSpec((1, 2, CP), lambda i: (i, 0, 0)),
        ),
        out_shape=(
            jax.ShapeDtypeStruct((M_pad, CP), jnp.float32),
            jax.ShapeDtypeStruct((nmt, 2, CP), jnp.float32),
        ),
        compiler_params=pltpu.CompilerParams(
            dimension_semantics=("parallel",),
            vmem_limit_bytes=VMEM_LIMIT,
        ),
        cost_estimate=pl.CostEstimate(
            flops=2 * M_pad * K * CP,
            transcendentals=0,
            bytes_accessed=int(M_pad * K * 2 + K * CP * 2
                               + M_pad * CP * 4 + nmt * 2 * CP * 4),
        ),
    )(patches, w_mat)

    # Global (training-mode) BN statistics from the per-tile partials (tiny).
    totals = jnp.sum(partials, axis=0)                       # (2, CP)
    mean = totals[0] / M                                     # true M, not padded
    var = jnp.maximum(totals[1] / M - mean * mean, 0.0)      # biased variance
    gamma_pad = jnp.zeros((CP,), jnp.float32).at[:Cout].set(gamma)
    beta_pad = jnp.zeros((CP,), jnp.float32).at[:Cout].set(beta)
    scale = gamma_pad * jax.lax.rsqrt(var + BN_EPS)
    bias = beta_pad - mean * scale

    # Pass 2: fused normalize (+ReLU), lane-dense output.
    out = pl.pallas_call(
        functools.partial(_bn_apply_kernel, apply_relu=apply_relu),
        grid=(nmt,),
        in_specs=[
            pl.BlockSpec((TM, CP), lambda i: (i, 0)),
            pl.BlockSpec((1, CP), lambda i: (0, 0)),
            pl.BlockSpec((1, CP), lambda i: (0, 0)),
        ],
        out_specs=pl.BlockSpec((TM, CP), lambda i: (i, 0)),
        out_shape=jax.ShapeDtypeStruct((M_pad, CP), out_dtype),
        compiler_params=pltpu.CompilerParams(
            dimension_semantics=("parallel",),
            vmem_limit_bytes=VMEM_LIMIT,
        ),
    )(conv_out, scale.reshape(1, CP), bias.reshape(1, CP))

    return out[:M, :Cout].reshape(N, Ho, Wo, Cout)


def basic_transform(x_nchw, params, stride):
    """Forward pass of BasicTransform. Input/output are NCHW like PyTorch."""
    x = jnp.transpose(x_nchw, (0, 2, 3, 1))  # NCHW -> NHWC
    x = conv3x3_bn(x, params["a_w"], params["a_gamma"], params["a_beta"],
                   stride=stride, apply_relu=True, out_dtype=jnp.bfloat16)
    x = conv3x3_bn(x, params["b_w"], params["b_gamma"], params["b_beta"],
                   stride=1, apply_relu=False, out_dtype=jnp.float32)
    return jnp.transpose(x, (0, 3, 1, 2))  # NHWC -> NCHW


def init_params(key, w_in, w_out):
    k1, k2 = jax.random.split(key)
    fan_a = w_in * 9
    fan_b = w_out * 9
    return {
        "a_w": jax.random.normal(k1, (w_out, w_in, 3, 3), jnp.float32) * (2.0 / fan_a) ** 0.5,
        "a_gamma": jnp.ones((w_out,), jnp.float32),
        "a_beta": jnp.zeros((w_out,), jnp.float32),
        "b_w": jax.random.normal(k2, (w_out, w_out, 3, 3), jnp.float32) * (2.0 / fan_b) ** 0.5,
        "b_gamma": jnp.ones((w_out,), jnp.float32),  # b_bn.final_bn is just a tag
        "b_beta": jnp.zeros((w_out,), jnp.float32),
    }


def _reference(x_nchw, params, stride):
    """Plain-JAX f32 reference (lax conv + train-mode BN) for correctness check."""
    def conv(x, w, s):
        return jax.lax.conv_general_dilated(
            x, w, (s, s), ((1, 1), (1, 1)),
            dimension_numbers=("NCHW", "OIHW", "NCHW"))

    def bn(x, gamma, beta):
        mean = jnp.mean(x, axis=(0, 2, 3), keepdims=True)
        var = jnp.mean(jnp.square(x - mean), axis=(0, 2, 3), keepdims=True)
        return ((x - mean) * jax.lax.rsqrt(var + BN_EPS)
                * gamma.reshape(1, -1, 1, 1) + beta.reshape(1, -1, 1, 1))

    y = jnp.maximum(bn(conv(x_nchw, params["a_w"], stride),
                       params["a_gamma"], params["a_beta"]), 0.0)
    return bn(conv(y, params["b_w"], 1), params["b_gamma"], params["b_beta"])


if __name__ == "__main__":
    key = jax.random.PRNGKey(0)
    kx, kp = jax.random.split(key)
    w_in, w_out, stride = 4, 8, 2
    x = jax.random.normal(kx, (2, w_in, 16, 16), jnp.float32)
    params = init_params(kp, w_in, w_out)

    fwd = jax.jit(basic_transform, static_argnums=2)
    y = jax.block_until_ready(fwd(x, params, stride))

    assert y.shape == (2, w_out, 16 // stride, 16 // stride), y.shape
    y_ref = _reference(x, params, stride)
    # Tolerance accounts for bf16 MXU inputs + bf16 intermediate activation
    # (accumulation and all BN statistics are kept in f32).
    err = float(jnp.max(jnp.abs(y - y_ref)))
    assert jnp.allclose(y, y_ref, atol=5e-2, rtol=5e-2), err
    print("KERNEL_OK")
</pallas_src>

<mosaic_0001>
module attributes {stable_mosaic.version = 11 : i64} {
  func.func @_matmul_stats_kernel(%arg0: i32, %arg1: memref<128x36xbf16, #tpu.memory_space<vmem>>, %arg2: memref<36x128xbf16, #tpu.memory_space<vmem>>, %arg3: memref<128x128xf32, #tpu.memory_space<vmem>>, %arg4: memref<1x2x128xf32, #tpu.memory_space<vmem>>) attributes {dimension_semantics = [#tpu.dimension_semantics<parallel>], iteration_bounds = array<i64: 1>, scalar_prefetch = 0 : i64, scratch_operands = 0 : i64, tpu.core_type = #tpu.core_type<tc>, window_params = [{transform_indices = @transform_0, window_bounds = array<i64: 128, 36>}, {pipeline_mode = #tpu.pipeline_mode<synchronous>, transform_indices = @transform_1, window_bounds = array<i64: 36, 128>}, {transform_indices = @transform_2, window_bounds = array<i64: 128, 128>}, {transform_indices = @transform_3, window_bounds = array<i64: 1, 2, 128>}]} {
    %c0 = arith.constant 0 : index
    %c0_0 = arith.constant 0 : index
    %0 = vector.load %arg1[%c0, %c0_0] : memref<128x36xbf16, #tpu.memory_space<vmem>>, vector<128x36xbf16>
    %c0_1 = arith.constant 0 : index
    %c0_2 = arith.constant 0 : index
    %1 = vector.load %arg2[%c0_1, %c0_2] : memref<36x128xbf16, #tpu.memory_space<vmem>>, vector<36x128xbf16>
    %cst = arith.constant dense<0.000000e+00> : vector<128x128xf32>
    %2 = tpu.matmul %0, %1, %cst {dimension_numbers = #tpu.dot_dimension_numbers<[1], [0], [0], [1], [0, 0, 1, 1], [], []>} : vector<128x36xbf16>, vector<36x128xbf16>, vector<128x128xf32> -> vector<128x128xf32>
    %c0_3 = arith.constant 0 : index
    %c0_4 = arith.constant 0 : index
    %3 = vector.load %arg3[%c0_3, %c0_4] : memref<128x128xf32, #tpu.memory_space<vmem>>, vector<128x128xf32>
    tpu.vector_store %arg3[%c0_3, %c0_4], %2 {strides = array<i32>} : memref<128x128xf32, #tpu.memory_space<vmem>>, vector<128x128xf32>,
    %cst_5 = arith.constant dense<0.000000e+00> : vector<128xf32>
    %4 = vector.multi_reduction <add>, %2, %cst_5 [0] : vector<128x128xf32> to vector<128xf32>
    %5 = vector.shape_cast %4 : vector<128xf32> to vector<1x128xf32>
    %c0_6 = arith.constant 0 : index
    %c0_7 = arith.constant 0 : index
    %c0_8 = arith.constant 0 : index
    %6 = vector.load %arg4[%c0_6, %c0_7, %c0_8] : memref<1x2x128xf32, #tpu.memory_space<vmem>>, vector<1x1x128xf32>
    %7 = vector.shape_cast %6 : vector<1x1x128xf32> to vector<1x128xf32>
    %8 = vector.shape_cast %5 : vector<1x128xf32> to vector<1x1x128xf32>
    tpu.vector_store %arg4[%c0_6, %c0_7, %c0_8], %8 {strides = array<i32>} : memref<1x2x128xf32, #tpu.memory_space<vmem>>, vector<1x1x128xf32>,
    %9 = arith.mulf %2, %2 : vector<128x128xf32>
    %cst_9 = arith.constant dense<0.000000e+00> : vector<128xf32>
    %10 = vector.multi_reduction <add>, %9, %cst_9 [0] : vector<128x128xf32> to vector<128xf32>
    %11 = vector.shape_cast %10 : vector<128xf32> to vector<1x128xf32>
    %c0_10 = arith.constant 0 : index
    %c1 = arith.constant 1 : index
    %c0_11 = arith.constant 0 : index
    %12 = vector.load %arg4[%c0_10, %c1, %c0_11] : memref<1x2x128xf32, #tpu.memory_space<vmem>>, vector<1x1x128xf32>
    %13 = vector.shape_cast %12 : vector<1x1x128xf32> to vector<1x128xf32>
    %14 = vector.shape_cast %11 : vector<1x128xf32> to vector<1x1x128xf32>
    tpu.vector_store %arg4[%c0_10, %c1, %c0_11], %14 {strides = array<i32>} : memref<1x2x128xf32, #tpu.memory_space<vmem>>, vector<1x1x128xf32>,
    return
  }
  func.func @transform_0(%arg0: i32) -> (i32, i32) {
    %c0_i32 = arith.constant 0 : i32
    %c0_i32_0 = arith.constant 0 : i32
    return %arg0, %c0_i32 : i32, i32
  }
  func.func @transform_1(%arg0: i32) -> (i32, i32) {
    %c0_i32 = arith.constant 0 : i32
    %c0_i32_0 = arith.constant 0 : i32
    %c0_i32_1 = arith.constant 0 : i32
    return %c0_i32, %c0_i32_0 : i32, i32
  }
  func.func @transform_2(%arg0: i32) -> (i32, i32) {
    %c0_i32 = arith.constant 0 : i32
    %c0_i32_0 = arith.constant 0 : i32
    return %arg0, %c0_i32 : i32, i32
  }
  func.func @transform_3(%arg0: i32) -> (i32, i32, i32) {
    %c0_i32 = arith.constant 0 : i32
    %c0_i32_0 = arith.constant 0 : i32
    %c0_i32_1 = arith.constant 0 : i32
    return %arg0, %c0_i32, %c0_i32_0 : i32, i32, i32
  }
}

module attributes {stable_mosaic.version = 11 : i64} {
  func.func @_bn_apply_kernel(%arg0: i32, %arg1: memref<128x128xf32, #tpu.memory_space<vmem>>, %arg2: memref<1x128xf32, #tpu.memory_space<vmem>>, %arg3: memref<1x128xf32, #tpu.memory_space<vmem>>, %arg4: memref<128x128xbf16, #tpu.memory_space<vmem>>) attributes {dimension_semantics = [#tpu.dimension_semantics<parallel>], iteration_bounds = array<i64: 1>, scalar_prefetch = 0 : i64, scratch_operands = 0 : i64, tpu.core_type = #tpu.core_type<tc>, window_params = [{transform_indices = @transform_0, window_bounds = array<i64: 128, 128>}, {pipeline_mode = #tpu.pipeline_mode<synchronous>, transform_indices = @transform_1, window_bounds = array<i64: 1, 128>}, {pipeline_mode = #tpu.pipeline_mode<synchronous>, transform_indices = @transform_2, window_bounds = array<i64: 1, 128>}, {transform_indices = @transform_3, window_bounds = array<i64: 128, 128>}]} {
    %c0 = arith.constant 0 : index
    %c0_0 = arith.constant 0 : index
    %0 = vector.load %arg1[%c0, %c0_0] : memref<128x128xf32, #tpu.memory_space<vmem>>, vector<128x128xf32>
    %c0_1 = arith.constant 0 : index
    %c0_2 = arith.constant 0 : index
    %1 = vector.load %arg2[%c0_1, %c0_2] : memref<1x128xf32, #tpu.memory_space<vmem>>, vector<1x128xf32>
    %2 = vector.broadcast %1 : vector<1x128xf32> to vector<128x128xf32>
    %3 = arith.mulf %0, %2 : vector<128x128xf32>
    %c0_3 = arith.constant 0 : index
    %c0_4 = arith.constant 0 : index
    %4 = vector.load %arg3[%c0_3, %c0_4] : memref<1x128xf32, #tpu.memory_space<vmem>>, vector<1x128xf32>
    %5 = vector.broadcast %4 : vector<1x128xf32> to vector<128x128xf32>
    %6 = arith.addf %3, %5 : vector<128x128xf32>
    %cst = arith.constant 0.000000e+00 : f32
    %7 = vector.broadcast %cst : f32 to vector<128x128xf32>
    %8 = arith.maximumf %6, %7 : vector<128x128xf32>
    %9 = arith.truncf %8 : vector<128x128xf32> to vector<128x128xbf16>
    %c0_5 = arith.constant 0 : index
    %c0_6 = arith.constant 0 : index
    %10 = vector.load %arg4[%c0_5, %c0_6] : memref<128x128xbf16, #tpu.memory_space<vmem>>, vector<128x128xbf16>
    tpu.vector_store %arg4[%c0_5, %c0_6], %9 {strides = array<i32>} : memref<128x128xbf16, #tpu.memory_space<vmem>>, vector<128x128xbf16>,
    return
  }
  func.func @transform_0(%arg0: i32) -> (i32, i32) {
    %c0_i32 = arith.constant 0 : i32
    %c0_i32_0 = arith.constant 0 : i32
    return %arg0, %c0_i32 : i32, i32
  }
  func.func @transform_1(%arg0: i32) -> (i32, i32) {
    %c0_i32 = arith.constant 0 : i32
    %c0_i32_0 = arith.constant 0 : i32
    %c0_i32_1 = arith.constant 0 : i32
    return %c0_i32, %c0_i32_0 : i32, i32
  }
  func.func @transform_2(%arg0: i32) -> (i32, i32) {
    %c0_i32 = arith.constant 0 : i32
    %c0_i32_0 = arith.constant 0 : i32
    %c0_i32_1 = arith.constant 0 : i32
    return %c0_i32, %c0_i32_0 : i32, i32
  }
  func.func @transform_3(%arg0: i32) -> (i32, i32) {
    %c0_i32 = arith.constant 0 : i32
    %c0_i32_0 = arith.constant 0 : i32
    return %arg0, %c0_i32 : i32, i32
  }
}

module attributes {stable_mosaic.version = 11 : i64} {
  func.func @_matmul_stats_kernel(%arg0: i32, %arg1: memref<128x72xbf16, #tpu.memory_space<vmem>>, %arg2: memref<72x128xbf16, #tpu.memory_space<vmem>>, %arg3: memref<128x128xf32, #tpu.memory_space<vmem>>, %arg4: memref<1x2x128xf32, #tpu.memory_space<vmem>>) attributes {dimension_semantics = [#tpu.dimension_semantics<parallel>], iteration_bounds = array<i64: 1>, scalar_prefetch = 0 : i64, scratch_operands = 0 : i64, tpu.core_type = #tpu.core_type<tc>, window_params = [{transform_indices = @transform_0, window_bounds = array<i64: 128, 72>}, {pipeline_mode = #tpu.pipeline_mode<synchronous>, transform_indices = @transform_1, window_bounds = array<i64: 72, 128>}, {transform_indices = @transform_2, window_bounds = array<i64: 128, 128>}, {transform_indices = @transform_3, window_bounds = array<i64: 1, 2, 128>}]} {
    %c0 = arith.constant 0 : index
    %c0_0 = arith.constant 0 : index
    %0 = vector.load %arg1[%c0, %c0_0] : memref<128x72xbf16, #tpu.memory_space<vmem>>, vector<128x72xbf16>
    %c0_1 = arith.constant 0 : index
    %c0_2 = arith.constant 0 : index
    %1 = vector.load %arg2[%c0_1, %c0_2] : memref<72x128xbf16, #tpu.memory_space<vmem>>, vector<72x128xbf16>
    %cst = arith.constant dense<0.000000e+00> : vector<128x128xf32>
    %2 = tpu.matmul %0, %1, %cst {dimension_numbers = #tpu.dot_dimension_numbers<[1], [0], [0], [1], [0, 0, 1, 1], [], []>} : vector<128x72xbf16>, vector<72x128xbf16>, vector<128x128xf32> -> vector<128x128xf32>
    %c0_3 = arith.constant 0 : index
    %c0_4 = arith.constant 0 : index
    %3 = vector.load %arg3[%c0_3, %c0_4] : memref<128x128xf32, #tpu.memory_space<vmem>>, vector<128x128xf32>
    tpu.vector_store %arg3[%c0_3, %c0_4], %2 {strides = array<i32>} : memref<128x128xf32, #tpu.memory_space<vmem>>, vector<128x128xf32>,
    %cst_5 = arith.constant dense<0.000000e+00> : vector<128xf32>
    %4 = vector.multi_reduction <add>, %2, %cst_5 [0] : vector<128x128xf32> to vector<128xf32>
    %5 = vector.shape_cast %4 : vector<128xf32> to vector<1x128xf32>
    %c0_6 = arith.constant 0 : index
    %c0_7 = arith.constant 0 : index
    %c0_8 = arith.constant 0 : index
    %6 = vector.load %arg4[%c0_6, %c0_7, %c0_8] : memref<1x2x128xf32, #tpu.memory_space<vmem>>, vector<1x1x128xf32>
    %7 = vector.shape_cast %6 : vector<1x1x128xf32> to vector<1x128xf32>
    %8 = vector.shape_cast %5 : vector<1x128xf32> to vector<1x1x128xf32>
    tpu.vector_store %arg4[%c0_6, %c0_7, %c0_8], %8 {strides = array<i32>} : memref<1x2x128xf32, #tpu.memory_space<vmem>>, vector<1x1x128xf32>,
    %9 = arith.mulf %2, %2 : vector<128x128xf32>
    %cst_9 = arith.constant dense<0.000000e+00> : vector<128xf32>
    %10 = vector.multi_reduction <add>, %9, %cst_9 [0] : vector<128x128xf32> to vector<128xf32>
    %11 = vector.shape_cast %10 : vector<128xf32> to vector<1x128xf32>
    %c0_10 = arith.constant 0 : index
    %c1 = arith.constant 1 : index
    %c0_11 = arith.constant 0 : index
    %12 = vector.load %arg4[%c0_10, %c1, %c0_11] : memref<1x2x128xf32, #tpu.memory_space<vmem>>, vector<1x1x128xf32>
    %13 = vector.shape_cast %12 : vector<1x1x128xf32> to vector<1x128xf32>
    %14 = vector.shape_cast %11 : vector<1x128xf32> to vector<1x1x128xf32>
    tpu.vector_store %arg4[%c0_10, %c1, %c0_11], %14 {strides = array<i32>} : memref<1x2x128xf32, #tpu.memory_space<vmem>>, vector<1x1x128xf32>,
    return
  }
  func.func @transform_0(%arg0: i32) -> (i32, i32) {
    %c0_i32 = arith.constant 0 : i32
    %c0_i32_0 = arith.constant 0 : i32
    return %arg0, %c0_i32 : i32, i32
  }
  func.func @transform_1(%arg0: i32) -> (i32, i32) {
    %c0_i32 = arith.constant 0 : i32
    %c0_i32_0 = arith.constant 0 : i32
    %c0_i32_1 = arith.constant 0 : i32
    return %c0_i32, %c0_i32_0 : i32, i32
  }
  func.func @transform_2(%arg0: i32) -> (i32, i32) {
    %c0_i32 = arith.constant 0 : i32
    %c0_i32_0 = arith.constant 0 : i32
    return %arg0, %c0_i32 : i32, i32
  }
  func.func @transform_3(%arg0: i32) -> (i32, i32, i32) {
    %c0_i32 = arith.constant 0 : i32
    %c0_i32_0 = arith.constant 0 : i32
    %c0_i32_1 = arith.constant 0 : i32
    return %arg0, %c0_i32, %c0_i32_0 : i32, i32, i32
  }
}

module attributes {stable_mosaic.version = 11 : i64} {
  func.func @_bn_apply_kernel(%arg0: i32, %arg1: memref<128x128xf32, #tpu.memory_space<vmem>>, %arg2: memref<1x128xf32, #tpu.memory_space<vmem>>, %arg3: memref<1x128xf32, #tpu.memory_space<vmem>>, %arg4: memref<128x128xf32, #tpu.memory_space<vmem>>) attributes {dimension_semantics = [#tpu.dimension_semantics<parallel>], iteration_bounds = array<i64: 1>, scalar_prefetch = 0 : i64, scratch_operands = 0 : i64, tpu.core_type = #tpu.core_type<tc>, window_params = [{transform_indices = @transform_0, window_bounds = array<i64: 128, 128>}, {pipeline_mode = #tpu.pipeline_mode<synchronous>, transform_indices = @transform_1, window_bounds = array<i64: 1, 128>}, {pipeline_mode = #tpu.pipeline_mode<synchronous>, transform_indices = @transform_2, window_bounds = array<i64: 1, 128>}, {transform_indices = @transform_3, window_bounds = array<i64: 128, 128>}]} {
    %c0 = arith.constant 0 : index
    %c0_0 = arith.constant 0 : index
    %0 = vector.load %arg1[%c0, %c0_0] : memref<128x128xf32, #tpu.memory_space<vmem>>, vector<128x128xf32>
    %c0_1 = arith.constant 0 : index
    %c0_2 = arith.constant 0 : index
    %1 = vector.load %arg2[%c0_1, %c0_2] : memref<1x128xf32, #tpu.memory_space<vmem>>, vector<1x128xf32>
    %2 = vector.broadcast %1 : vector<1x128xf32> to vector<128x128xf32>
    %3 = arith.mulf %0, %2 : vector<128x128xf32>
    %c0_3 = arith.constant 0 : index
    %c0_4 = arith.constant 0 : index
    %4 = vector.load %arg3[%c0_3, %c0_4] : memref<1x128xf32, #tpu.memory_space<vmem>>, vector<1x128xf32>
    %5 = vector.broadcast %4 : vector<1x128xf32> to vector<128x128xf32>
    %6 = arith.addf %3, %5 : vector<128x128xf32>
    %c0_5 = arith.constant 0 : index
    %c0_6 = arith.constant 0 : index
    %7 = vector.load %arg4[%c0_5, %c0_6] : memref<128x128xf32, #tpu.memory_space<vmem>>, vector<128x128xf32>
    tpu.vector_store %arg4[%c0_5, %c0_6], %6 {strides = array<i32>} : memref<128x128xf32, #tpu.memory_space<vmem>>, vector<128x128xf32>,
    return
  }
  func.func @transform_0(%arg0: i32) -> (i32, i32) {
    %c0_i32 = arith.constant 0 : i32
    %c0_i32_0 = arith.constant 0 : i32
    return %arg0, %c0_i32 : i32, i32
  }
  func.func @transform_1(%arg0: i32) -> (i32, i32) {
    %c0_i32 = arith.constant 0 : i32
    %c0_i32_0 = arith.constant 0 : i32
    %c0_i32_1 = arith.constant 0 : i32
    return %c0_i32, %c0_i32_0 : i32, i32
  }
  func.func @transform_2(%arg0: i32) -> (i32, i32) {
    %c0_i32 = arith.constant 0 : i32
    %c0_i32_0 = arith.constant 0 : i32
    %c0_i32_1 = arith.constant 0 : i32
    return %c0_i32, %c0_i32_0 : i32, i32
  }
  func.func @transform_3(%arg0: i32) -> (i32, i32) {
    %c0_i32 = arith.constant 0 : i32
    %c0_i32_0 = arith.constant 0 : i32
    return %arg0, %c0_i32 : i32, i32
  }
}

</mosaic_0001>

<llo_original>
// kernel: basic_transform.4
$region0: #{basic_transform.4}
  #allocation0 [shape = 'u32[]', space=smem, size = 0x4, offset = 0x4, fixed_abs, tag = 'smem constant byte address 0x4 - core index']
  #allocation1 [shape = 'u32[144,128]{1,0:T(1,128)}', space=vmem, size = 0x12000, scoped, tag = 'internal scratch']
  %s0 = inlined_call_operand.vmem [shape: bf16[128,36], index: 0, kind: input, shape index: {}]
  %s1 = inlined_call_operand.vmem [shape: bf16[36,128], index: 1, kind: input, shape index: {}]
  %s2 = inlined_call_operand.vmem [shape: f32[128,128], index: 2, kind: output, shape index: {0}]
  %s3 = inlined_call_operand.vmem [shape: f32[1,2,128], index: 3, kind: output, shape index: {1}]
  %4 = xla_tuple %s2, %s3
  %s5 = sld [smem:[#allocation0]]
  $region26: #{basic_transform.4} parent=0
    _
  %s7 = ssub.s32 1, %s5
  %s8 = scalar_select 0, %s7, %s5
  // Predicated region
  $region2: #{basic_transform.4} parent=0 // pred_check
    _
  $region3: #{basic_transform.4} parent=0 // pred_check_branch
    %10 = sbr.rel (0) target = $region5
  $region4: #{basic_transform.4} parent=0 // pred_region
    _
  $region5: #{basic_transform.4} parent=0 // pred_fallthru
    _
  // Predicated region
  $region6: #{basic_transform.4} parent=0 // pred_check
    _
  $region7: #{basic_transform.4} parent=0 // pred_check_branch
    %12 = sbr.rel (0) target = $region9
  $region8: #{basic_transform.4} parent=0 // pred_region
    _
  $region9: #{basic_transform.4} parent=0 // pred_fallthru
    _
  %v14 = vld [vmem:[%s0] sm:$0xf]
  %v15 = vld [vmem:[%s0 + $0x4] sm:$0xf]
  %v16 = vld [vmem:[%s0 + $0x8] sm:$0xf]
  %v17 = vld [vmem:[%s0 + $0xc] sm:$0xf]
  %v18 = vld [vmem:[%s0 + $0x10] sm:$0xf]
  %v19 = vld [vmem:[%s0 + $0x14] sm:$0xf]
  %v20 = vld [vmem:[%s0 + $0x18] sm:$0xf]
  %v21 = vld [vmem:[%s0 + $0x1c] sm:$0xf]
  %v22 = vld [vmem:[%s0 + $0x20] sm:$0xf]
  %v23 = vld [vmem:[%s0 + $0x24] sm:$0xf]
  %v24 = vld [vmem:[%s0 + $0x28] sm:$0xf]
  %v25 = vld [vmem:[%s0 + $0x2c] sm:$0xf]
  %v26 = vld [vmem:[%s0 + $0x30] sm:$0xf]
  %v27 = vld [vmem:[%s0 + $0x34] sm:$0xf]
  %v28 = vld [vmem:[%s0 + $0x38] sm:$0xf]
  %v29 = vld [vmem:[%s0 + $0x3c] sm:$0xf]
  %v30 = vld [vmem:[%s1] sm:$0xf]
  %v31 = vld [vmem:[%s1 + $0x4] sm:$0xf]
  %v32 = vld [vmem:[%s1 + $0x8] sm:$0xf]
  %v33 = vld [vmem:[%s1 + $0xc] sm:$0xf]
  %v34 = vld [vmem:[%s1 + $0x10] sm:$0x3]
  %v51 = vunpack.c.l.b16 %v14
  %v52 = vunpack.c.l.b16 %v15
  %v53 = vunpack.c.l.b16 %v16
  %v54 = vunpack.c.l.b16 %v17
  %v55 = vunpack.c.l.b16 %v18
  %v56 = vunpack.c.l.b16 %v19
  %v57 = vunpack.c.l.b16 %v20
  %v58 = vunpack.c.l.b16 %v21
  %v59 = vunpack.c.l.b16 %v22
  %v60 = vunpack.c.l.b16 %v23
  %v61 = vunpack.c.l.b16 %v24
  %v62 = vunpack.c.l.b16 %v25
  %v63 = vunpack.c.l.b16 %v26
  %v64 = vunpack.c.l.b16 %v27
  %v65 = vunpack.c.l.b16 %v28
  %v66 = vunpack.c.l.b16 %v29
  %v67 = vpack.c.b16 %v52, %v51
  %v68 = vpack.c.b16 %v54, %v53
  %v69 = vpack.c.b16 %v56, %v55
  %v70 = vpack.c.b16 %v58, %v57
  %v71 = vpack.c.b16 %v60, %v59
  %v72 = vpack.c.b16 %v62, %v61
  %v73 = vpack.c.b16 %v64, %v63
  %v74 = vpack.c.b16 %v66, %v65
  %v80 = vunpack.c.l.b16 %v30
  %v81 = vunpack.c.l.b16 %v31
  %v82 = vunpack.c.l.b16 %v32
  %v83 = vunpack.c.l.b16 %v33
  %v84 = vunpack.c.l.b16 %v34
  %v85 = vpack.c.b16 %v81, %v80
  %v86 = vpack.c.b16 %v83, %v82
  %v87 = vpack.c.b16 %v84, %v84
  %vm90 = vcmask 293888
  %v92 = vsel %vm90, %v67, 0
  %v95 = vsel %vm90, %v68, 0
  %v98 = vsel %vm90, %v69, 0
  %v101 = vsel %vm90, %v70, 0
  %v104 = vsel %vm90, %v71, 0
  %v107 = vsel %vm90, %v72, 0
  %v110 = vsel %vm90, %v73, 0
  %v113 = vsel %vm90, %v74, 0
  %vm115 = vcmask 1041408
  %v117 = vsel %vm115, %v87, 0
  %119 = vmatprep.subr.bf16.mxu0 0
  %120 = vmatpush1.bf16.msra.mxu0 %v85
  %121 = vmatprep.subr.bf16.mxu0 0
  %122 = vmatpush1.bf16.msra.mxu0 %v86
  %123 = vmatprep.subr.bf16.mxu0 0
  %124 = vmatpush1.bf16.msra.mxu0 %v117
  %125 = vmatprep.subr.bf16.mxu0 0
  %126 = vmatpush1.bf16.msra.mxu0 0
  %127 = vmatprep.subr.bf16.mxu0 0
  %128 = vmatpush1.bf16.msra.mxu0 0
  %129 = vmatprep.subr.bf16.mxu0 0
  %130 = vmatpush1.bf16.msra.mxu0 0
  %131 = vmatprep.subr.bf16.mxu0 0
  %132 = vmatpush1.bf16.msra.mxu0 0
  %133 = vmatprep.subr.bf16.mxu0 0
  %134 = vmatpush1.bf16.msra.mxu0 0
  %135 = vmatprep.subr.bf16.mxu0 0
  %136 = vmatpush1.bf16.msra.mxu0 0
  %137 = vmatprep.subr.bf16.mxu0 0
  %138 = vmatpush1.bf16.msra.mxu0 0
  %139 = vmatprep.subr.bf16.mxu0 0
  %140 = vmatpush1.bf16.msra.mxu0 0
  %141 = vmatprep.subr.bf16.mxu0 0
  %142 = vmatpush1.bf16.msra.mxu0 0
  %143 = vmatprep.subr.bf16.mxu0 0
  %144 = vmatpush1.bf16.msra.mxu0 0
  %145 = vmatprep.subr.bf16.mxu0 0
  %146 = vmatpush1.bf16.msra.mxu0 0
  %147 = vmatprep.subr.bf16.mxu0 0
  %148 = vmatpush1.bf16.msra.mxu0 0
  %149 = vmatprep.subr.bf16.mxu0 0
  %150 = vmatpush1.bf16.msra.mxu0 0
  %151 = vmatprep.mubr.bf16.mxu0 0
  %152 = vmatmul.mubr.bf16.gmra.mrb[0].mxu0 %v92
  %v153 = vpop.f32.mrb[0].mxu0
  %v154 = vadd.f32 0.0, %v153
  %v155 = vpop.f32.mrb[0].mxu0
  %v156 = vpop.f32.mrb[0].mxu0
  %v157 = vadd.f32 0.0, %v156
  %v158 = vpop.f32.mrb[0].mxu0
  %159 = vmatprep.mubr.bf16.mxu0 0
  %160 = vmatmul.mubr.bf16.gmra.mrb[0].mxu0 %v95
  %v161 = vpop.f32.mrb[0].mxu0
  %v162 = vadd.f32 0.0, %v161
  %v163 = vpop.f32.mrb[0].mxu0
  %v164 = vpop.f32.mrb[0].mxu0
  %v165 = vadd.f32 0.0, %v164
  %v166 = vpop.f32.mrb[0].mxu0
  %167 = vmatprep.mubr.bf16.mxu0 0
  %168 = vmatmul.mubr.bf16.gmra.mrb[0].mxu0 %v98
  %v169 = vpop.f32.mrb[0].mxu0
  %v170 = vadd.f32 0.0, %v169
  %v171 = vpop.f32.mrb[0].mxu0
  %v172 = vpop.f32.mrb[0].mxu0
  %v173 = vadd.f32 0.0, %v172
  %v174 = vpop.f32.mrb[0].mxu0
  %175 = vmatprep.mubr.bf16.mxu0 0
  %176 = vmatmul.mubr.bf16.gmra.mrb[0].mxu0 %v101
  %v177 = vpop.f32.mrb[0].mxu0
  %v178 = vadd.f32 0.0, %v177
  %v179 = vpop.f32.mrb[0].mxu0
  %v180 = vpop.f32.mrb[0].mxu0
  %v181 = vadd.f32 0.0, %v180
  %v182 = vpop.f32.mrb[0].mxu0
  %183 = vmatprep.mubr.bf16.mxu0 0
  %184 = vmatmul.mubr.bf16.gmra.mrb[0].mxu0 %v104
  %v185 = vpop.f32.mrb[0].mxu0
  %v186 = vadd.f32 0.0, %v185
  %v187 = vpop.f32.mrb[0].mxu0
  %v188 = vpop.f32.mrb[0].mxu0
  %v189 = vadd.f32 0.0, %v188
  %v190 = vpop.f32.mrb[0].mxu0
  %191 = vmatprep.mubr.bf16.mxu0 0
  %192 = vmatmul.mubr.bf16.gmra.mrb[0].mxu0 %v107
  %v193 = vpop.f32.mrb[0].mxu0
  %v194 = vadd.f32 0.0, %v193
  %v195 = vpop.f32.mrb[0].mxu0
  %v196 = vpop.f32.mrb[0].mxu0
  %v197 = vadd.f32 0.0, %v196
  %v198 = vpop.f32.mrb[0].mxu0
  %199 = vmatprep.mubr.bf16.mxu0 0
  %200 = vmatmul.mubr.bf16.gmra.mrb[0].mxu0 %v110
  %v201 = vpop.f32.mrb[0].mxu0
  %v202 = vadd.f32 0.0, %v201
  %v203 = vpop.f32.mrb[0].mxu0
  %v204 = vpop.f32.mrb[0].mxu0
  %v205 = vadd.f32 0.0, %v204
  %v206 = vpop.f32.mrb[0].mxu0
  %207 = vmatprep.mubr.bf16.mxu0 0
  %208 = vmatmul.mubr.bf16.gmra.mrb[0].mxu0 %v113
  %v209 = vpop.f32.mrb[0].mxu0
  %v210 = vadd.f32 0.0, %v209
  %v211 = vpop.f32.mrb[0].mxu0
  %v212 = vpop.f32.mrb[0].mxu0
  %v213 = vadd.f32 0.0, %v212
  %v214 = vpop.f32.mrb[0].mxu0
  %215 = vdwg.mxu0
  %216 = vst [vmem:[%s2] sm:$0xff] %v154
  %217 = vst [vmem:[%s2 + $0x8] sm:$0xff] %v157
  %218 = vst [vmem:[%s2 + $0x10] sm:$0xff] %v162
  %219 = vst [vmem:[%s2 + $0x18] sm:$0xff] %v165
  %220 = vst [vmem:[%s2 + $0x20] sm:$0xff] %v170
  %221 = vst [vmem:[%s2 + $0x28] sm:$0xff] %v173
  %222 = vst [vmem:[%s2 + $0x30] sm:$0xff] %v178
  %223 = vst [vmem:[%s2 + $0x38] sm:$0xff] %v181
  %224 = vst [vmem:[%s2 + $0x40] sm:$0xff] %v186
  %225 = vst [vmem:[%s2 + $0x48] sm:$0xff] %v189
  %226 = vst [vmem:[%s2 + $0x50] sm:$0xff] %v194
  %227 = vst [vmem:[%s2 + $0x58] sm:$0xff] %v197
  %228 = vst [vmem:[%s2 + $0x60] sm:$0xff] %v202
  %229 = vst [vmem:[%s2 + $0x68] sm:$0xff] %v205
  %230 = vst [vmem:[%s2 + $0x70] sm:$0xff] %v210
  %231 = vst [vmem:[%s2 + $0x78] sm:$0xff] %v213
  %v232 = vadd.f32 %v154, %v157
  %v233 = vadd.f32 %v232, %v162
  %v234 = vadd.f32 %v233, %v165
  %v235 = vadd.f32 %v234, %v170
  %v236 = vadd.f32 %v235, %v173
  %v237 = vadd.f32 %v236, %v178
  %v238 = vadd.f32 %v237, %v181
  %v239 = vadd.f32 %v238, %v186
  %v240 = vadd.f32 %v239, %v189
  %v241 = vadd.f32 %v240, %v194
  %v242 = vadd.f32 %v241, %v197
  %v243 = vadd.f32 %v242, %v202
  %v244 = vadd.f32 %v243, %v205
  %v245 = vadd.f32 %v244, %v210
  %v246 = vadd.f32 %v245, %v213
  %v247 = vrot.slane %v246, 4
  %v248 = vadd.f32 %v246, %v247
  %v249 = vrot.slane %v248, 2
  %v250 = vadd.f32 %v248, %v249
  %v251 = vrot.slane %v250, 1
  %v252 = vadd.f32 %v250, %v251
  %253 = vst [vmem:[%s3] sm:$0x1] %v252
  %v254 = vmul.f32 %v154, %v154
  %v255 = vmul.f32 %v157, %v157
  %v256 = vmul.f32 %v162, %v162
  %v257 = vmul.f32 %v165, %v165
  %v258 = vmul.f32 %v170, %v170
  %v259 = vmul.f32 %v173, %v173
  %v260 = vmul.f32 %v178, %v178
  %v261 = vmul.f32 %v181, %v181
  %v262 = vmul.f32 %v186, %v186
  %v263 = vmul.f32 %v189, %v189
  %v264 = vmul.f32 %v194, %v194
  %v265 = vmul.f32 %v197, %v197
  %v266 = vmul.f32 %v202, %v202
  %v267 = vmul.f32 %v205, %v205
  %v268 = vmul.f32 %v210, %v210
  %v269 = vmul.f32 %v213, %v213
  %v270 = vadd.f32 %v254, %v255
  %v271 = vadd.f32 %v270, %v256
  %v272 = vadd.f32 %v271, %v257
  %v273 = vadd.f32 %v272, %v258
  %v274 = vadd.f32 %v273, %v259
  %v275 = vadd.f32 %v274, %v260
  %v276 = vadd.f32 %v275, %v261
  %v277 = vadd.f32 %v276, %v262
  %v278 = vadd.f32 %v277, %v263
  %v279 = vadd.f32 %v278, %v264
  %v280 = vadd.f32 %v279, %v265
  %v281 = vadd.f32 %v280, %v266
  %v282 = vadd.f32 %v281, %v267
  %v283 = vadd.f32 %v282, %v268
  %v284 = vadd.f32 %v283, %v269
  %v285 = vrot.slane %v284, 4
  %v286 = vadd.f32 %v284, %v285
  %v287 = vrot.slane %v286, 2
  %v288 = vadd.f32 %v286, %v287
  %v289 = vrot.slane %v288, 1
  %v290 = vadd.f32 %v288, %v289
  %291 = vst [vmem:[%s3 + $0x1] sm:$0x1] %v290
  // Predicated region
  $region10: #{basic_transform.4} parent=0 // pred_check
    _
  $region11: #{basic_transform.4} parent=0 // pred_check_branch
    %293 = sbr.rel (0) target = $region13
  $region12: #{basic_transform.4} parent=0 // pred_region
    _
  $region13: #{basic_transform.4} parent=0 // pred_fallthru
    _
  // Predicated region
  $region14: #{basic_transform.4} parent=0 // pred_check
    _
  $region15: #{basic_transform.4} parent=0 // pred_check_branch
    %295 = sbr.rel (0) target = $region17
  $region16: #{basic_transform.4} parent=0 // pred_region
    _
  $region17: #{basic_transform.4} parent=0 // pred_fallthru
    _
  // Predicated region
  $region18: #{basic_transform.4} parent=0 // pred_check
    _
  $region19: #{basic_transform.4} parent=0 // pred_check_branch
    %297 = sbr.rel (0) target = $region21
  $region20: #{basic_transform.4} parent=0 // pred_region
    _
  $region21: #{basic_transform.4} parent=0 // pred_fallthru
    _
  // Predicated region
  $region22: #{basic_transform.4} parent=0 // pred_check
    _
  $region23: #{basic_transform.4} parent=0 // pred_check_branch
    %299 = sbr.rel (0) target = $region25
  $region24: #{basic_transform.4} parent=0 // pred_region
    _
  $region25: #{basic_transform.4} parent=0 // pred_fallthru
    _

// kernel: basic_transform.5
$region0: #{basic_transform.5}
  #allocation0 [shape = 'u32[]', space=smem, size = 0x4, offset = 0x4, fixed_abs, tag = 'smem constant byte address 0x4 - core index']
  #allocation1 [shape = 'u32[144,128]{1,0:T(1,128)}', space=vmem, size = 0x12000, scoped, tag = 'internal scratch']
  %s0 = inlined_call_operand.vmem [shape: f32[128,128], index: 0, kind: input, shape index: {}]
  %s1 = inlined_call_operand.vmem [shape: f32[1,128], index: 1, kind: input, shape index: {}]
  %s2 = inlined_call_operand.vmem [shape: f32[1,128], index: 2, kind: input, shape index: {}]
  %s3 = inlined_call_operand.vmem [shape: bf16[128,128], index: 3, kind: output, shape index: {}]
  %s4 = sld [smem:[#allocation0]]
  $region22: #{basic_transform.5} parent=0
    _
  %s6 = ssub.s32 1, %s4
  %s7 = scalar_select 0, %s6, %s4
  // Predicated region
  $region2: #{basic_transform.5} parent=0 // pred_check
    _
  $region3: #{basic_transform.5} parent=0 // pred_check_branch
    %9 = sbr.rel (0) target = $region5
  $region4: #{basic_transform.5} parent=0 // pred_region
    _
  $region5: #{basic_transform.5} parent=0 // pred_fallthru
    _
  // Predicated region
  $region6: #{basic_transform.5} parent=0 // pred_check
    _
  $region7: #{basic_transform.5} parent=0 // pred_check_branch
    %11 = sbr.rel (0) target = $region9
  $region8: #{basic_transform.5} parent=0 // pred_region
    _
  $region9: #{basic_transform.5} parent=0 // pred_fallthru
    _
  // Predicated region
  $region10: #{basic_transform.5} parent=0 // pred_check
    _
  $region11: #{basic_transform.5} parent=0 // pred_check_branch
    %13 = sbr.rel (0) target = $region13
  $region12: #{basic_transform.5} parent=0 // pred_region
    _
  $region13: #{basic_transform.5} parent=0 // pred_fallthru
    _
  %v14 = vld [vmem:[%s0] sm:$0xff]
  %v15 = vld [vmem:[%s0 + $0x8] sm:$0xff]
  %v16 = vld [vmem:[%s0 + $0x10] sm:$0xff]
  %v17 = vld [vmem:[%s0 + $0x18] sm:$0xff]
  %v18 = vld [vmem:[%s0 + $0x20] sm:$0xff]
  %v19 = vld [vmem:[%s0 + $0x28] sm:$0xff]
  %v20 = vld [vmem:[%s0 + $0x30] sm:$0xff]
  %v21 = vld [vmem:[%s0 + $0x38] sm:$0xff]
  %v22 = vld [vmem:[%s0 + $0x40] sm:$0xff]
  %v23 = vld [vmem:[%s0 + $0x48] sm:$0xff]
  %v24 = vld [vmem:[%s0 + $0x50] sm:$0xff]
  %v25 = vld [vmem:[%s0 + $0x58] sm:$0xff]
  %v26 = vld [vmem:[%s0 + $0x60] sm:$0xff]
  %v27 = vld [vmem:[%s0 + $0x68] sm:$0xff]
  %v28 = vld [vmem:[%s0 + $0x70] sm:$0xff]
  %v29 = vld [vmem:[%s0 + $0x78] sm:$0xff]
  %v30 = vld [vmem:[%s1] sm:$0x1]
  %v32 = vlaneseq
  %v33 = vshrl.u32 %v32, 7
  %v34 = vsub.s32 0, %v33
  %v35 = vrot.slane %v30, %v34
  %v37 = vmul.f32 %v14, %v35
  %v38 = vmul.f32 %v15, %v35
  %v39 = vmul.f32 %v16, %v35
  %v40 = vmul.f32 %v17, %v35
  %v41 = vmul.f32 %v18, %v35
  %v42 = vmul.f32 %v19, %v35
  %v43 = vmul.f32 %v20, %v35
  %v44 = vmul.f32 %v21, %v35
  %v45 = vmul.f32 %v22, %v35
  %v46 = vmul.f32 %v23, %v35
  %v47 = vmul.f32 %v24, %v35
  %v48 = vmul.f32 %v25, %v35
  %v49 = vmul.f32 %v26, %v35
  %v50 = vmul.f32 %v27, %v35
  %v51 = vmul.f32 %v28, %v35
  %v52 = vmul.f32 %v29, %v35
  %v53 = vld [vmem:[%s2] sm:$0x1]
  %v55 = vlaneseq
  %v56 = vshrl.u32 %v55, 7
  %v57 = vsub.s32 0, %v56
  %v58 = vrot.slane %v53, %v57
  %v60 = vadd.f32 %v37, %v58
  %v61 = vadd.f32 %v38, %v58
  %v62 = vadd.f32 %v39, %v58
  %v63 = vadd.f32 %v40, %v58
  %v64 = vadd.f32 %v41, %v58
  %v65 = vadd.f32 %v42, %v58
  %v66 = vadd.f32 %v43, %v58
  %v67 = vadd.f32 %v44, %v58
  %v68 = vadd.f32 %v45, %v58
  %v69 = vadd.f32 %v46, %v58
  %v70 = vadd.f32 %v47, %v58
  %v71 = vadd.f32 %v48, %v58
  %v72 = vadd.f32 %v49, %v58
  %v73 = vadd.f32 %v50, %v58
  %v74 = vadd.f32 %v51, %v58
  %v75 = vadd.f32 %v52, %v58
  %v76 = vmax.f32 %v60, 0.0
  %v77 = vmax.f32 %v61, 0.0
  %v78 = vmax.f32 %v62, 0.0
  %v79 = vmax.f32 %v63, 0.0
  %v80 = vmax.f32 %v64, 0.0
  %v81 = vmax.f32 %v65, 0.0
  %v82 = vmax.f32 %v66, 0.0
  %v83 = vmax.f32 %v67, 0.0
  %v84 = vmax.f32 %v68, 0.0
  %v85 = vmax.f32 %v69, 0.0
  %v86 = vmax.f32 %v70, 0.0
  %v87 = vmax.f32 %v71, 0.0
  %v88 = vmax.f32 %v72, 0.0
  %v89 = vmax.f32 %v73, 0.0
  %v90 = vmax.f32 %v74, 0.0
  %v91 = vmax.f32 %v75, 0.0
  %v92 = vpack.c.bf16 %v77, %v76
  %v93 = vpack.c.bf16 %v79, %v78
  %v94 = vpack.c.bf16 %v81, %v80
  %v95 = vpack.c.bf16 %v83, %v82
  %v96 = vpack.c.bf16 %v85, %v84
  %v97 = vpack.c.bf16 %v87, %v86
  %v98 = vpack.c.bf16 %v89, %v88
  %v99 = vpack.c.bf16 %v91, %v90
  %v108 = vunpack.c.l.b16 %v92
  %v109 = vunpack.c.h.b16 %v92
  %v110 = vunpack.c.l.b16 %v93
  %v111 = vunpack.c.h.b16 %v93
  %v112 = vunpack.c.l.b16 %v94
  %v113 = vunpack.c.h.b16 %v94
  %v114 = vunpack.c.l.b16 %v95
  %v115 = vunpack.c.h.b16 %v95
  %v116 = vunpack.c.l.b16 %v96
  %v117 = vunpack.c.h.b16 %v96
  %v118 = vunpack.c.l.b16 %v97
  %v119 = vunpack.c.h.b16 %v97
  %v120 = vunpack.c.l.b16 %v98
  %v121 = vunpack.c.h.b16 %v98
  %v122 = vunpack.c.l.b16 %v99
  %v123 = vunpack.c.h.b16 %v99
  %v124 = vpack.c.b16 %v108, %v108
  %v125 = vpack.c.b16 %v109, %v109
  %v126 = vpack.c.b16 %v110, %v110
  %v127 = vpack.c.b16 %v111, %v111
  %v128 = vpack.c.b16 %v112, %v112
  %v129 = vpack.c.b16 %v113, %v113
  %v130 = vpack.c.b16 %v114, %v114
  %v131 = vpack.c.b16 %v115, %v115
  %v132 = vpack.c.b16 %v116, %v116
  %v133 = vpack.c.b16 %v117, %v117
  %v134 = vpack.c.b16 %v118, %v118
  %v135 = vpack.c.b16 %v119, %v119
  %v136 = vpack.c.b16 %v120, %v120
  %v137 = vpack.c.b16 %v121, %v121
  %v138 = vpack.c.b16 %v122, %v122
  %v139 = vpack.c.b16 %v123, %v123
  %156 = vst [vmem:[%s3] sm:$0xf] %v124
  %157 = vst [vmem:[%s3 + $0x4] sm:$0xf] %v125
  %158 = vst [vmem:[%s3 + $0x8] sm:$0xf] %v126
  %159 = vst [vmem:[%s3 + $0xc] sm:$0xf] %v127
  %160 = vst [vmem:[%s3 + $0x10] sm:$0xf] %v128
  %161 = vst [vmem:[%s3 + $0x14] sm:$0xf] %v129
  %162 = vst [vmem:[%s3 + $0x18] sm:$0xf] %v130
  %163 = vst [vmem:[%s3 + $0x1c] sm:$0xf] %v131
  %164 = vst [vmem:[%s3 + $0x20] sm:$0xf] %v132
  %165 = vst [vmem:[%s3 + $0x24] sm:$0xf] %v133
  %166 = vst [vmem:[%s3 + $0x28] sm:$0xf] %v134
  %167 = vst [vmem:[%s3 + $0x2c] sm:$0xf] %v135
  %168 = vst [vmem:[%s3 + $0x30] sm:$0xf] %v136
  %169 = vst [vmem:[%s3 + $0x34] sm:$0xf] %v137
  %170 = vst [vmem:[%s3 + $0x38] sm:$0xf] %v138
  %171 = vst [vmem:[%s3 + $0x3c] sm:$0xf] %v139
  // Predicated region
  $region14: #{basic_transform.5} parent=0 // pred_check
    _
  $region15: #{basic_transform.5} parent=0 // pred_check_branch
    %173 = sbr.rel (0) target = $region17
  $region16: #{basic_transform.5} parent=0 // pred_region
    _
  $region17: #{basic_transform.5} parent=0 // pred_fallthru
    _
  // Predicated region
  $region18: #{basic_transform.5} parent=0 // pred_check
    _
  $region19: #{basic_transform.5} parent=0 // pred_check_branch
    %175 = sbr.rel (0) target = $region21
  $region20: #{basic_transform.5} parent=0 // pred_region
    _
  $region21: #{basic_transform.5} parent=0 // pred_fallthru
    _

// kernel: basic_transform.7
$region0: #{basic_transform.7}
  #allocation0 [shape = 'u32[]', space=smem, size = 0x4, offset = 0x4, fixed_abs, tag = 'smem constant byte address 0x4 - core index']
  #allocation1 [shape = 'u32[144,128]{1,0:T(1,128)}', space=vmem, size = 0x12000, scoped, tag = 'internal scratch']
  %s0 = inlined_call_operand.vmem [shape: f32[128,128], index: 0, kind: input, shape index: {}]
  %s1 = inlined_call_operand.vmem [shape: f32[1,128], index: 1, kind: input, shape index: {}]
  %s2 = inlined_call_operand.vmem [shape: f32[1,128], index: 2, kind: input, shape index: {}]
  %s3 = inlined_call_operand.vmem [shape: f32[128,128], index: 3, kind: output, shape index: {}]
  %s4 = sld [smem:[#allocation0]]
  $region22: #{basic_transform.7} parent=0
    _
  %s6 = ssub.s32 1, %s4
  %s7 = scalar_select 0, %s6, %s4
  // Predicated region
  $region2: #{basic_transform.7} parent=0 // pred_check
    _
  $region3: #{basic_transform.7} parent=0 // pred_check_branch
    %9 = sbr.rel (0) target = $region5
  $region4: #{basic_transform.7} parent=0 // pred_region
    _
  $region5: #{basic_transform.7} parent=0 // pred_fallthru
    _
  // Predicated region
  $region6: #{basic_transform.7} parent=0 // pred_check
    _
  $region7: #{basic_transform.7} parent=0 // pred_check_branch
    %11 = sbr.rel (0) target = $region9
  $region8: #{basic_transform.7} parent=0 // pred_region
    _
  $region9: #{basic_transform.7} parent=0 // pred_fallthru
    _
  // Predicated region
  $region10: #{basic_transform.7} parent=0 // pred_check
    _
  $region11: #{basic_transform.7} parent=0 // pred_check_branch
    %13 = sbr.rel (0) target = $region13
  $region12: #{basic_transform.7} parent=0 // pred_region
    _
  $region13: #{basic_transform.7} parent=0 // pred_fallthru
    _
  %v14 = vld [vmem:[%s0] sm:$0xff]
  %v15 = vld [vmem:[%s0 + $0x8] sm:$0xff]
  %v16 = vld [vmem:[%s0 + $0x10] sm:$0xff]
  %v17 = vld [vmem:[%s0 + $0x18] sm:$0xff]
  %v18 = vld [vmem:[%s0 + $0x20] sm:$0xff]
  %v19 = vld [vmem:[%s0 + $0x28] sm:$0xff]
  %v20 = vld [vmem:[%s0 + $0x30] sm:$0xff]
  %v21 = vld [vmem:[%s0 + $0x38] sm:$0xff]
  %v22 = vld [vmem:[%s0 + $0x40] sm:$0xff]
  %v23 = vld [vmem:[%s0 + $0x48] sm:$0xff]
  %v24 = vld [vmem:[%s0 + $0x50] sm:$0xff]
  %v25 = vld [vmem:[%s0 + $0x58] sm:$0xff]
  %v26 = vld [vmem:[%s0 + $0x60] sm:$0xff]
  %v27 = vld [vmem:[%s0 + $0x68] sm:$0xff]
  %v28 = vld [vmem:[%s0 + $0x70] sm:$0xff]
  %v29 = vld [vmem:[%s0 + $0x78] sm:$0xff]
  %v30 = vld [vmem:[%s1] sm:$0x1]
  %v32 = vlaneseq
  %v33 = vshrl.u32 %v32, 7
  %v34 = vsub.s32 0, %v33
  %v35 = vrot.slane %v30, %v34
  %v37 = vmul.f32 %v14, %v35
  %v38 = vmul.f32 %v15, %v35
  %v39 = vmul.f32 %v16, %v35
  %v40 = vmul.f32 %v17, %v35
  %v41 = vmul.f32 %v18, %v35
  %v42 = vmul.f32 %v19, %v35
  %v43 = vmul.f32 %v20, %v35
  %v44 = vmul.f32 %v21, %v35
  %v45 = vmul.f32 %v22, %v35
  %v46 = vmul.f32 %v23, %v35
  %v47 = vmul.f32 %v24, %v35
  %v48 = vmul.f32 %v25, %v35
  %v49 = vmul.f32 %v26, %v35
  %v50 = vmul.f32 %v27, %v35
  %v51 = vmul.f32 %v28, %v35
  %v52 = vmul.f32 %v29, %v35
  %v53 = vld [vmem:[%s2] sm:$0x1]
  %v55 = vlaneseq
  %v56 = vshrl.u32 %v55, 7
  %v57 = vsub.s32 0, %v56
  %v58 = vrot.slane %v53, %v57
  %v60 = vadd.f32 %v37, %v58
  %v61 = vadd.f32 %v38, %v58
  %v62 = vadd.f32 %v39, %v58
  %v63 = vadd.f32 %v40, %v58
  %v64 = vadd.f32 %v41, %v58
  %v65 = vadd.f32 %v42, %v58
  %v66 = vadd.f32 %v43, %v58
  %v67 = vadd.f32 %v44, %v58
  %v68 = vadd.f32 %v45, %v58
  %v69 = vadd.f32 %v46, %v58
  %v70 = vadd.f32 %v47, %v58
  %v71 = vadd.f32 %v48, %v58
  %v72 = vadd.f32 %v49, %v58
  %v73 = vadd.f32 %v50, %v58
  %v74 = vadd.f32 %v51, %v58
  %v75 = vadd.f32 %v52, %v58
  %76 = vst [vmem:[%s3] sm:$0xff] %v60
  %77 = vst [vmem:[%s3 + $0x8] sm:$0xff] %v61
  %78 = vst [vmem:[%s3 + $0x10] sm:$0xff] %v62
  %79 = vst [vmem:[%s3 + $0x18] sm:$0xff] %v63
  %80 = vst [vmem:[%s3 + $0x20] sm:$0xff] %v64
  %81 = vst [vmem:[%s3 + $0x28] sm:$0xff] %v65
  %82 = vst [vmem:[%s3 + $0x30] sm:$0xff] %v66
  %83 = vst [vmem:[%s3 + $0x38] sm:$0xff] %v67
  %84 = vst [vmem:[%s3 + $0x40] sm:$0xff] %v68
  %85 = vst [vmem:[%s3 + $0x48] sm:$0xff] %v69
  %86 = vst [vmem:[%s3 + $0x50] sm:$0xff] %v70
  %87 = vst [vmem:[%s3 + $0x58] sm:$0xff] %v71
  %88 = vst [vmem:[%s3 + $0x60] sm:$0xff] %v72
  %89 = vst [vmem:[%s3 + $0x68] sm:$0xff] %v73
  %90 = vst [vmem:[%s3 + $0x70] sm:$0xff] %v74
  %91 = vst [vmem:[%s3 + $0x78] sm:$0xff] %v75
  // Predicated region
  $region14: #{basic_transform.7} parent=0 // pred_check
    _
  $region15: #{basic_transform.7} parent=0 // pred_check_branch
    %93 = sbr.rel (0) target = $region17
  $region16: #{basic_transform.7} parent=0 // pred_region
    _
  $region17: #{basic_transform.7} parent=0 // pred_fallthru
    _
  // Predicated region
  $region18: #{basic_transform.7} parent=0 // pred_check
    _
  $region19: #{basic_transform.7} parent=0 // pred_check_branch
    %95 = sbr.rel (0) target = $region21
  $region20: #{basic_transform.7} parent=0 // pred_region
    _
  $region21: #{basic_transform.7} parent=0 // pred_fallthru
    _

// kernel: basic_transform.6
$region0: #{basic_transform.6}
  #allocation0 [shape = 'u32[]', space=smem, size = 0x4, offset = 0x4, fixed_abs, tag = 'smem constant byte address 0x4 - core index']
  #allocation1 [shape = 'u32[144,128]{1,0:T(1,128)}', space=vmem, size = 0x12000, scoped, tag = 'internal scratch']
  %s0 = inlined_call_operand.vmem [shape: bf16[128,72], index: 0, kind: input, shape index: {}]
  %s1 = inlined_call_operand.vmem [shape: bf16[72,128], index: 1, kind: input, shape index: {}]
  %s2 = inlined_call_operand.vmem [shape: f32[128,128], index: 2, kind: output, shape index: {0}]
  %s3 = inlined_call_operand.vmem [shape: f32[1,2,128], index: 3, kind: output, shape index: {1}]
  %4 = xla_tuple %s2, %s3
  %s5 = sld [smem:[#allocation0]]
  $region26: #{basic_transform.6} parent=0
    _
  %s7 = ssub.s32 1, %s5
  %s8 = scalar_select 0, %s7, %s5
  // Predicated region
  $region2: #{basic_transform.6} parent=0 // pred_check
    _
  $region3: #{basic_transform.6} parent=0 // pred_check_branch
    %10 = sbr.rel (0) target = $region5
  $region4: #{basic_transform.6} parent=0 // pred_region
    _
  $region5: #{basic_transform.6} parent=0 // pred_fallthru
    _
  // Predicated region
  $region6: #{basic_transform.6} parent=0 // pred_check
    _
  $region7: #{basic_transform.6} parent=0 // pred_check_branch
    %12 = sbr.rel (0) target = $region9
  $region8: #{basic_transform.6} parent=0 // pred_region
    _
  $region9: #{basic_transform.6} parent=0 // pred_fallthru
    _
  %v14 = vld [vmem:[%s0] sm:$0xf]
  %v15 = vld [vmem:[%s0 + $0x4] sm:$0xf]
  %v16 = vld [vmem:[%s0 + $0x8] sm:$0xf]
  %v17 = vld [vmem:[%s0 + $0xc] sm:$0xf]
  %v18 = vld [vmem:[%s0 + $0x10] sm:$0xf]
  %v19 = vld [vmem:[%s0 + $0x14] sm:$0xf]
  %v20 = vld [vmem:[%s0 + $0x18] sm:$0xf]
  %v21 = vld [vmem:[%s0 + $0x1c] sm:$0xf]
  %v22 = vld [vmem:[%s0 + $0x20] sm:$0xf]
  %v23 = vld [vmem:[%s0 + $0x24] sm:$0xf]
  %v24 = vld [vmem:[%s0 + $0x28] sm:$0xf]
  %v25 = vld [vmem:[%s0 + $0x2c] sm:$0xf]
  %v26 = vld [vmem:[%s0 + $0x30] sm:$0xf]
  %v27 = vld [vmem:[%s0 + $0x34] sm:$0xf]
  %v28 = vld [vmem:[%s0 + $0x38] sm:$0xf]
  %v29 = vld [vmem:[%s0 + $0x3c] sm:$0xf]
  %v30 = vld [vmem:[%s1] sm:$0xf]
  %v31 = vld [vmem:[%s1 + $0x4] sm:$0xf]
  %v32 = vld [vmem:[%s1 + $0x8] sm:$0xf]
  %v33 = vld [vmem:[%s1 + $0xc] sm:$0xf]
  %v34 = vld [vmem:[%s1 + $0x10] sm:$0xf]
  %v35 = vld [vmem:[%s1 + $0x14] sm:$0xf]
  %v36 = vld [vmem:[%s1 + $0x18] sm:$0xf]
  %v37 = vld [vmem:[%s1 + $0x1c] sm:$0xf]
  %v38 = vld [vmem:[%s1 + $0x20] sm:$0xf]
  %v55 = vunpack.c.l.b16 %v14
  %v56 = vunpack.c.l.b16 %v15
  %v57 = vunpack.c.l.b16 %v16
  %v58 = vunpack.c.l.b16 %v17
  %v59 = vunpack.c.l.b16 %v18
  %v60 = vunpack.c.l.b16 %v19
  %v61 = vunpack.c.l.b16 %v20
  %v62 = vunpack.c.l.b16 %v21
  %v63 = vunpack.c.l.b16 %v22
  %v64 = vunpack.c.l.b16 %v23
  %v65 = vunpack.c.l.b16 %v24
  %v66 = vunpack.c.l.b16 %v25
  %v67 = vunpack.c.l.b16 %v26
  %v68 = vunpack.c.l.b16 %v27
  %v69 = vunpack.c.l.b16 %v28
  %v70 = vunpack.c.l.b16 %v29
  %v71 = vpack.c.b16 %v56, %v55
  %v72 = vpack.c.b16 %v58, %v57
  %v73 = vpack.c.b16 %v60, %v59
  %v74 = vpack.c.b16 %v62, %v61
  %v75 = vpack.c.b16 %v64, %v63
  %v76 = vpack.c.b16 %v66, %v65
  %v77 = vpack.c.b16 %v68, %v67
  %v78 = vpack.c.b16 %v70, %v69
  %v88 = vunpack.c.l.b16 %v30
  %v89 = vunpack.c.l.b16 %v31
  %v90 = vunpack.c.l.b16 %v32
  %v91 = vunpack.c.l.b16 %v33
  %v92 = vunpack.c.l.b16 %v34
  %v93 = vunpack.c.l.b16 %v35
  %v94 = vunpack.c.l.b16 %v36
  %v95 = vunpack.c.l.b16 %v37
  %v96 = vunpack.c.l.b16 %v38
  %v97 = vpack.c.b16 %v89, %v88
  %v98 = vpack.c.b16 %v91, %v90
  %v99 = vpack.c.b16 %v93, %v92
  %v100 = vpack.c.b16 %v95, %v94
  %v101 = vpack.c.b16 %v96, %v96
  %vm106 = vcmask 588800
  %v108 = vsel %vm106, %v71, 0
  %v111 = vsel %vm106, %v72, 0
  %v114 = vsel %vm106, %v73, 0
  %v117 = vsel %vm106, %v74, 0
  %v120 = vsel %vm106, %v75, 0
  %v123 = vsel %vm106, %v76, 0
  %v126 = vsel %vm106, %v77, 0
  %v129 = vsel %vm106, %v78, 0
  %vm131 = vcmask 1043456
  %v133 = vsel %vm131, %v101, 0
  %135 = vmatprep.subr.bf16.mxu0 0
  %136 = vmatpush1.bf16.msra.mxu0 %v97
  %137 = vmatprep.subr.bf16.mxu0 0
  %138 = vmatpush1.bf16.msra.mxu0 %v98
  %139 = vmatprep.subr.bf16.mxu0 0
  %140 = vmatpush1.bf16.msra.mxu0 %v99
  %141 = vmatprep.subr.bf16.mxu0 0
  %142 = vmatpush1.bf16.msra.mxu0 %v100
  %143 = vmatprep.subr.bf16.mxu0 0
  %144 = vmatpush1.bf16.msra.mxu0 %v133
  %145 = vmatprep.subr.bf16.mxu0 0
  %146 = vmatpush1.bf16.msra.mxu0 0
  %147 = vmatprep.subr.bf16.mxu0 0
  %148 = vmatpush1.bf16.msra.mxu0 0
  %149 = vmatprep.subr.bf16.mxu0 0
  %150 = vmatpush1.bf16.msra.mxu0 0
  %151 = vmatprep.subr.bf16.mxu0 0
  %152 = vmatpush1.bf16.msra.mxu0 0
  %153 = vmatprep.subr.bf16.mxu0 0
  %154 = vmatpush1.bf16.msra.mxu0 0
  %155 = vmatprep.subr.bf16.mxu0 0
  %156 = vmatpush1.bf16.msra.mxu0 0
  %157 = vmatprep.subr.bf16.mxu0 0
  %158 = vmatpush1.bf16.msra.mxu0 0
  %159 = vmatprep.subr.bf16.mxu0 0
  %160 = vmatpush1.bf16.msra.mxu0 0
  %161 = vmatprep.subr.bf16.mxu0 0
  %162 = vmatpush1.bf16.msra.mxu0 0
  %163 = vmatprep.subr.bf16.mxu0 0
  %164 = vmatpush1.bf16.msra.mxu0 0
  %165 = vmatprep.subr.bf16.mxu0 0
  %166 = vmatpush1.bf16.msra.mxu0 0
  %167 = vmatprep.mubr.bf16.mxu0 0
  %168 = vmatmul.mubr.bf16.gmra.mrb[0].mxu0 %v108
  %v169 = vpop.f32.mrb[0].mxu0
  %v170 = vadd.f32 0.0, %v169
  %v171 = vpop.f32.mrb[0].mxu0
  %v172 = vpop.f32.mrb[0].mxu0
  %v173 = vadd.f32 0.0, %v172
  %v174 = vpop.f32.mrb[0].mxu0
  %175 = vmatprep.mubr.bf16.mxu0 0
  %176 = vmatmul.mubr.bf16.gmra.mrb[0].mxu0 %v111
  %v177 = vpop.f32.mrb[0].mxu0
  %v178 = vadd.f32 0.0, %v177
  %v179 = vpop.f32.mrb[0].mxu0
  %v180 = vpop.f32.mrb[0].mxu0
  %v181 = vadd.f32 0.0, %v180
  %v182 = vpop.f32.mrb[0].mxu0
  %183 = vmatprep.mubr.bf16.mxu0 0
  %184 = vmatmul.mubr.bf16.gmra.mrb[0].mxu0 %v114
  %v185 = vpop.f32.mrb[0].mxu0
  %v186 = vadd.f32 0.0, %v185
  %v187 = vpop.f32.mrb[0].mxu0
  %v188 = vpop.f32.mrb[0].mxu0
  %v189 = vadd.f32 0.0, %v188
  %v190 = vpop.f32.mrb[0].mxu0
  %191 = vmatprep.mubr.bf16.mxu0 0
  %192 = vmatmul.mubr.bf16.gmra.mrb[0].mxu0 %v117
  %v193 = vpop.f32.mrb[0].mxu0
  %v194 = vadd.f32 0.0, %v193
  %v195 = vpop.f32.mrb[0].mxu0
  %v196 = vpop.f32.mrb[0].mxu0
  %v197 = vadd.f32 0.0, %v196
  %v198 = vpop.f32.mrb[0].mxu0
  %199 = vmatprep.mubr.bf16.mxu0 0
  %200 = vmatmul.mubr.bf16.gmra.mrb[0].mxu0 %v120
  %v201 = vpop.f32.mrb[0].mxu0
  %v202 = vadd.f32 0.0, %v201
  %v203 = vpop.f32.mrb[0].mxu0
  %v204 = vpop.f32.mrb[0].mxu0
  %v205 = vadd.f32 0.0, %v204
  %v206 = vpop.f32.mrb[0].mxu0
  %207 = vmatprep.mubr.bf16.mxu0 0
  %208 = vmatmul.mubr.bf16.gmra.mrb[0].mxu0 %v123
  %v209 = vpop.f32.mrb[0].mxu0
  %v210 = vadd.f32 0.0, %v209
  %v211 = vpop.f32.mrb[0].mxu0
  %v212 = vpop.f32.mrb[0].mxu0
  %v213 = vadd.f32 0.0, %v212
  %v214 = vpop.f32.mrb[0].mxu0
  %215 = vmatprep.mubr.bf16.mxu0 0
  %216 = vmatmul.mubr.bf16.gmra.mrb[0].mxu0 %v126
  %v217 = vpop.f32.mrb[0].mxu0
  %v218 = vadd.f32 0.0, %v217
  %v219 = vpop.f32.mrb[0].mxu0
  %v220 = vpop.f32.mrb[0].mxu0
  %v221 = vadd.f32 0.0, %v220
  %v222 = vpop.f32.mrb[0].mxu0
  %223 = vmatprep.mubr.bf16.mxu0 0
  %224 = vmatmul.mubr.bf16.gmra.mrb[0].mxu0 %v129
  %v225 = vpop.f32.mrb[0].mxu0
  %v226 = vadd.f32 0.0, %v225
  %v227 = vpop.f32.mrb[0].mxu0
  %v228 = vpop.f32.mrb[0].mxu0
  %v229 = vadd.f32 0.0, %v228
  %v230 = vpop.f32.mrb[0].mxu0
  %231 = vdwg.mxu0
  %232 = vst [vmem:[%s2] sm:$0xff] %v170
  %233 = vst [vmem:[%s2 + $0x8] sm:$0xff] %v173
  %234 = vst [vmem:[%s2 + $0x10] sm:$0xff] %v178
  %235 = vst [vmem:[%s2 + $0x18] sm:$0xff] %v181
  %236 = vst [vmem:[%s2 + $0x20] sm:$0xff] %v186
  %237 = vst [vmem:[%s2 + $0x28] sm:$0xff] %v189
  %238 = vst [vmem:[%s2 + $0x30] sm:$0xff] %v194
  %239 = vst [vmem:[%s2 + $0x38] sm:$0xff] %v197
  %240 = vst [vmem:[%s2 + $0x40] sm:$0xff] %v202
  %241 = vst [vmem:[%s2 + $0x48] sm:$0xff] %v205
  %242 = vst [vmem:[%s2 + $0x50] sm:$0xff] %v210
  %243 = vst [vmem:[%s2 + $0x58] sm:$0xff] %v213
  %244 = vst [vmem:[%s2 + $0x60] sm:$0xff] %v218
  %245 = vst [vmem:[%s2 + $0x68] sm:$0xff] %v221
  %246 = vst [vmem:[%s2 + $0x70] sm:$0xff] %v226
  %247 = vst [vmem:[%s2 + $0x78] sm:$0xff] %v229
  %v248 = vadd.f32 %v170, %v173
  %v249 = vadd.f32 %v248, %v178
  %v250 = vadd.f32 %v249, %v181
  %v251 = vadd.f32 %v250, %v186
  %v252 = vadd.f32 %v251, %v189
  %v253 = vadd.f32 %v252, %v194
  %v254 = vadd.f32 %v253, %v197
  %v255 = vadd.f32 %v254, %v202
  %v256 = vadd.f32 %v255, %v205
  %v257 = vadd.f32 %v256, %v210
  %v258 = vadd.f32 %v257, %v213
  %v259 = vadd.f32 %v258, %v218
  %v260 = vadd.f32 %v259, %v221
  %v261 = vadd.f32 %v260, %v226
  %v262 = vadd.f32 %v261, %v229
  %v263 = vrot.slane %v262, 4
  %v264 = vadd.f32 %v262, %v263
  %v265 = vrot.slane %v264, 2
  %v266 = vadd.f32 %v264, %v265
  %v267 = vrot.slane %v266, 1
  %v268 = vadd.f32 %v266, %v267
  %269 = vst [vmem:[%s3] sm:$0x1] %v268
  %v270 = vmul.f32 %v170, %v170
  %v271 = vmul.f32 %v173, %v173
  %v272 = vmul.f32 %v178, %v178
  %v273 = vmul.f32 %v181, %v181
  %v274 = vmul.f32 %v186, %v186
  %v275 = vmul.f32 %v189, %v189
  %v276 = vmul.f32 %v194, %v194
  %v277 = vmul.f32 %v197, %v197
  %v278 = vmul.f32 %v202, %v202
  %v279 = vmul.f32 %v205, %v205
  %v280 = vmul.f32 %v210, %v210
  %v281 = vmul.f32 %v213, %v213
  %v282 = vmul.f32 %v218, %v218
  %v283 = vmul.f32 %v221, %v221
  %v284 = vmul.f32 %v226, %v226
  %v285 = vmul.f32 %v229, %v229
  %v286 = vadd.f32 %v270, %v271
  %v287 = vadd.f32 %v286, %v272
  %v288 = vadd.f32 %v287, %v273
  %v289 = vadd.f32 %v288, %v274
  %v290 = vadd.f32 %v289, %v275
  %v291 = vadd.f32 %v290, %v276
  %v292 = vadd.f32 %v291, %v277
  %v293 = vadd.f32 %v292, %v278
  %v294 = vadd.f32 %v293, %v279
  %v295 = vadd.f32 %v294, %v280
  %v296 = vadd.f32 %v295, %v281
  %v297 = vadd.f32 %v296, %v282
  %v298 = vadd.f32 %v297, %v283
  %v299 = vadd.f32 %v298, %v284
  %v300 = vadd.f32 %v299, %v285
  %v301 = vrot.slane %v300, 4
  %v302 = vadd.f32 %v300, %v301
  %v303 = vrot.slane %v302, 2
  %v304 = vadd.f32 %v302, %v303
  %v305 = vrot.slane %v304, 1
  %v306 = vadd.f32 %v304, %v305
  %307 = vst [vmem:[%s3 + $0x1] sm:$0x1] %v306
  // Predicated region
  $region10: #{basic_transform.6} parent=0 // pred_check
    _
  $region11: #{basic_transform.6} parent=0 // pred_check_branch
    %309 = sbr.rel (0) target = $region13
  $region12: #{basic_transform.6} parent=0 // pred_region
    _
  $region13: #{basic_transform.6} parent=0 // pred_fallthru
    _
  // Predicated region
  $region14: #{basic_transform.6} parent=0 // pred_check
    _
  $region15: #{basic_transform.6} parent=0 // pred_check_branch
    %311 = sbr.rel (0) target = $region17
  $region16: #{basic_transform.6} parent=0 // pred_region
    _
  $region17: #{basic_transform.6} parent=0 // pred_fallthru
    _
  // Predicated region
  $region18: #{basic_transform.6} parent=0 // pred_check
    _
  $region19: #{basic_transform.6} parent=0 // pred_check_branch
    %313 = sbr.rel (0) target = $region21
  $region20: #{basic_transform.6} parent=0 // pred_region
    _
  $region21: #{basic_transform.6} parent=0 // pred_fallthru
    _
  // Predicated region
  $region22: #{basic_transform.6} parent=0 // pred_check
    _
  $region23: #{basic_transform.6} parent=0 // pred_check_branch
    %315 = sbr.rel (0) target = $region25
  $region24: #{basic_transform.6} parent=0 // pred_region
    _
  $region25: #{basic_transform.6} parent=0 // pred_fallthru
    _

</llo_original>
